<compile_context>
chip_gen: v5e
topology: v5e:2x2
jax: 0.10.0
libtpu: 0.0.40
codegen_flags: <defaults>
</compile_context>

<pallas_src>
import functools

import jax
import jax.numpy as jnp
from jax.experimental import pallas as pl
from jax.experimental.pallas import tpu as pltpu

_LANES = 128
_SUBLANES = 8
_TARGET_BLOCK_BYTES = 4 * 1024 * 1024      # ~4 MiB per stream per grid step
_VMEM_LIMIT_BYTES = 48 * 1024 * 1024       # fits v7x (64 MiB phys) and v5e/v6e
_MAX_SMEM_WEIGHTS = 8192                   # per-region weight vector cap (SMEM)
_CLAMP = -100.0                            # PyTorch clamps each log term at -100
_NCORES = 2                                # leading "parallel" axis for megacore


def _cparams(semantics):
    return pltpu.CompilerParams(dimension_semantics=semantics,
                                vmem_limit_bytes=_VMEM_LIMIT_BYTES)


def _bce_elem(x, t, w=None):
    """Per-element BCE in f32.  With x==1, t==1 the result is exactly 0, which
    makes padded / masked tail elements benign."""
    x = x.astype(jnp.float32)
    t = t.astype(jnp.float32)
    log_x = jnp.maximum(jnp.log(x), _CLAMP)
    log_1mx = jnp.maximum(jnp.log1p(-x), _CLAMP)
    # == -(t*log_x + (1-t)*log_1mx), one fewer multiply per element.
    loss = -(log_1mx + t * (log_x - log_1mx))
    if w is not None:
        loss = loss * w.astype(jnp.float32)
    return loss


def _partial_8x128(loss):
    """Reduce a (r, 128) f32 tile to an (8, 128) partial with VALU adds only."""
    r = loss.shape[0]
    if r % _SUBLANES == 0:
        return loss.reshape(r // _SUBLANES, _SUBLANES, _LANES).sum(axis=0)
    # Tiny-tile fallback (r < 8 or not a multiple of 8).
    col = loss.sum(axis=0, keepdims=True)                          # (1, 128)
    first_row = jax.lax.broadcasted_iota(jnp.int32, (_SUBLANES, _LANES), 0) == 0
    return jnp.where(first_row, col, 0.0)                          # (8, 128)


# ----------------------------------------------------------------------------
# 'mean'/'sum' kernel (unweighted or full-size weight slab):
#   grid = (ncore, blocks_per_core); resident (1,8,128) f32 accumulator per core.
# ----------------------------------------------------------------------------
def _bce_sum_kernel(*refs, rows, tile_rows, bpc, mask_from, weighted):
    if weighted:
        x_ref, t_ref, w_ref, o_ref = refs
    else:
        x_ref, t_ref, o_ref = refs
        w_ref = None
    c = pl.program_id(0)
    j = pl.program_id(1)
    blk = c * bpc + j

    @pl.when(j == 0)
    def _init():
        o_ref[...] = jnp.zeros_like(o_ref)

    def _accumulate(apply_row_mask):
        loss = _bce_elem(x_ref[...], t_ref[...],
                         None if w_ref is None else w_ref[...])
        if apply_row_mask:
            row = (jax.lax.broadcasted_iota(jnp.int32, loss.shape, 0)
                   + blk * tile_rows)
            loss = jnp.where(row < rows, loss, 0.0)
        o_ref[...] += _partial_8x128(loss)[None]

    if mask_from is None:                 # exact tiling: never pay the mask
        _accumulate(False)
    else:                                 # mask only overhang/phantom blocks
        @pl.when(blk < mask_from)
        def _fast():
            _accumulate(False)

        @pl.when(blk >= mask_from)
        def _tail():
            _accumulate(True)


# ----------------------------------------------------------------------------
# 'none' kernel (unweighted or full-size weight slab).
# ----------------------------------------------------------------------------
def _bce_none_kernel(*refs, weighted):
    if weighted:
        x_ref, t_ref, w_ref, o_ref = refs
    else:
        x_ref, t_ref, o_ref = refs
        w_ref = None
    loss = _bce_elem(x_ref[...], t_ref[...],
                     None if w_ref is None else w_ref[...])
    o_ref[...] = loss.astype(o_ref.dtype)


# ----------------------------------------------------------------------------
# Broadcastable-weight ("region") kernels: weight is constant over each
# contiguous block of B elements (B % 128 == 0).  The per-region weight vector
# is scalar-prefetched into SMEM; only x and t are streamed from HBM.
# ----------------------------------------------------------------------------
def _bce_region_sum_kernel(w_ref, x_ref, t_ref, o_ref):
    p = pl.program_id(0)
    j = pl.program_id(1)

    @pl.when(jnp.logical_and(p == 0, j == 0))
    def _init():
        o_ref[...] = jnp.zeros_like(o_ref)

    w = w_ref[p]                                   # f32 scalar from SMEM
    loss = _bce_elem(x_ref[0], t_ref[0]) * w       # (tile_r, 128)
    o_ref[...] += _partial_8x128(loss)[None]


def _bce_region_none_kernel(w_ref, x_ref, t_ref, o_ref):
    w = w_ref[pl.program_id(0)]
    loss = _bce_elem(x_ref[...], t_ref[...]) * w
    o_ref[...] = loss.astype(o_ref.dtype)


# ----------------------------------------------------------------------------
# Wrapper helpers.
# ----------------------------------------------------------------------------
def _target_rows(dtype, block_rows):
    if block_rows is not None:
        t = int(block_rows)
    else:
        itemsize = max(4, jnp.dtype(dtype).itemsize)   # f32 compute footprint
        t = _TARGET_BLOCK_BYTES // (_LANES * itemsize)
    return max(_SUBLANES, t - (t % _SUBLANES))


def _slab_tile_rows(rows, dtype, block_rows):
    t = _target_rows(dtype, block_rows)
    return rows if rows <= t else t


def _region_tile_rows(region_rows, dtype, block_rows):
    t = _target_rows(dtype, block_rows)
    if region_rows <= t:
        return region_rows
    t -= t % _SUBLANES
    while t >= _SUBLANES:
        if region_rows % t == 0:
            return t
        t -= _SUBLANES
    return None


def _as_lane_slab(a, pad_val):
    """View `a` as a lane-dense (rows, 128) slab in its native dtype.
    Free contiguous reshape when a.size % 128 == 0 (the usual case)."""
    flat = a.reshape(-1)
    rem = flat.shape[0] % _LANES
    if rem:
        # TODO(synk): rare size%128!=0 path still pays one small jnp.pad copy;
        # an in-kernel lane mask would remove it entirely.
        flat = jnp.pad(flat, (0, _LANES - rem), constant_values=pad_val)
    return flat.reshape(-1, _LANES)


def _finalize(total, reduction, n_elem, dtype):
    if reduction == "mean":
        total = total / jnp.float32(n_elem)
    return total.astype(dtype)


class BCELoss:
    """Pallas port of mmpn BCELoss (F.binary_cross_entropy)."""

    def __init__(self, weight=None, reduction="mean"):
        self.weight = None if weight is None else jnp.asarray(weight)
        self.reduction = reduction

    def __call__(self, inputs, target):
        return bce_loss(inputs, target, weight=self.weight,
                        reduction=self.reduction)


@functools.partial(jax.jit, static_argnames=("reduction", "block_rows"))
def bce_loss(inputs, target, weight=None, reduction="mean", block_rows=None):
    if reduction not in ("none", "mean", "sum"):
        raise ValueError(f"unsupported reduction: {reduction}")
    if inputs.shape != target.shape:
        raise ValueError("input/target shape mismatch")
    orig_shape = inputs.shape
    n_elem = int(inputs.size)

    # ---- classify the weight (all decisions are static: shapes only) -------
    w_mode, w_slab, w_vec = "none", None, None
    region_rows = n_regions = tile_r = None
    if weight is not None:
        w = jnp.asarray(weight)
        if w.size == n_elem:
            w_mode = "full"
            w_slab = _as_lane_slab(w, 0.0)
        else:
            ws = (1,) * (inputs.ndim - w.ndim) + tuple(w.shape)
            if len(ws) != inputs.ndim or any(
                    s not in (1, d) for s, d in zip(ws, orig_shape)):
                raise ValueError("weight is not broadcastable to input shape")
            nz = [d for d, s in enumerate(ws) if s != 1]
            d_last = nz[-1] if nz else -1
            b = 1
            for d in orig_shape[d_last + 1:]:
                b *= int(d)
            n_regions = n_elem // b if b else 0
            if b % _LANES == 0 and 0 < n_regions <= _MAX_SMEM_WEIGHTS:
                region_rows = b // _LANES
                tile_r = _region_tile_rows(region_rows, inputs.dtype, block_rows)
            if tile_r is not None:
                w_mode = "region"
                lead = orig_shape[:d_last + 1]
                w_vec = jnp.broadcast_to(
                    w.reshape(ws[:d_last + 1]).astype(jnp.float32),
                    lead).reshape(-1)                       # (n_regions,) f32
            else:
                # TODO(synk): weight-broadcast patterns whose trailing block is
                # not a multiple of 128 lanes still materialize the broadcast
                # weight in HBM (rare; e.g. per-column weights).
                w_mode = "full"
                w_slab = _as_lane_slab(
                    jnp.broadcast_to(w.reshape(ws), orig_shape)
                    .astype(inputs.dtype), 0.0)

    # ---- broadcastable-weight ("region") paths: no full-size weight stream --
    if w_mode == "region":
        x3 = inputs.reshape(n_regions, region_rows, _LANES)
        t3 = target.reshape(n_regions, region_rows, _LANES)
        region_blocks = region_rows // tile_r
        in_spec = pl.BlockSpec((1, tile_r, _LANES), lambda p, j, wv: (p, j, 0))

        if reduction == "none":
            out = pl.pallas_call(
                _bce_region_none_kernel,
                out_shape=jax.ShapeDtypeStruct(
                    (n_regions, region_rows, _LANES), inputs.dtype),
                grid_spec=pltpu.PrefetchScalarGridSpec(
                    num_scalar_prefetch=1,
                    grid=(n_regions, region_blocks),
                    in_specs=[in_spec, in_spec],
                    out_specs=pl.BlockSpec((1, tile_r, _LANES),
                                           lambda p, j, wv: (p, j, 0))),
                compiler_params=_cparams(("parallel", "parallel")),
            )(w_vec, x3, t3)
            return out.reshape(orig_shape)

        partial = pl.pallas_call(
            _bce_region_sum_kernel,
            out_shape=jax.ShapeDtypeStruct((1, _SUBLANES, _LANES), jnp.float32),
            grid_spec=pltpu.PrefetchScalarGridSpec(
                num_scalar_prefetch=1,
                grid=(n_regions, region_blocks),
                in_specs=[in_spec, in_spec],
                out_specs=pl.BlockSpec((1, _SUBLANES, _LANES),
                                       lambda p, j, wv: (0, 0, 0))),
            compiler_params=_cparams(("arbitrary", "arbitrary")),
        )(w_vec, x3, t3)
        return _finalize(jnp.sum(partial), reduction, n_elem, inputs.dtype)

    # ---- lane-dense slab paths (no weight / full-size weight) --------------
    x_slab = _as_lane_slab(inputs, 1.0)
    t_slab = _as_lane_slab(target, 1.0)
    rows = x_slab.shape[0]
    weighted = w_mode == "full"
    operands = [x_slab, t_slab] + ([w_slab] if weighted else [])

    tr = _slab_tile_rows(rows, inputs.dtype, block_rows)
    nb = pl.cdiv(rows, tr)

    if reduction == "none":
        spec2d = pl.BlockSpec((tr, _LANES), lambda i: (i, 0))
        out = pl.pallas_call(
            functools.partial(_bce_none_kernel, weighted=weighted),
            out_shape=jax.ShapeDtypeStruct((rows, _LANES), inputs.dtype),
            grid_spec=pltpu.PrefetchScalarGridSpec(
                num_scalar_prefetch=0,
                grid=(nb,),
                in_specs=[spec2d] * len(operands),
                out_specs=spec2d),
            compiler_params=_cparams(("parallel",)),
        )(*operands)
        if rows * _LANES == n_elem:
            return out.reshape(orig_shape)            # free contiguous reshape
        return out.reshape(-1)[:n_elem].reshape(orig_shape)

    # 'mean'/'sum': (core, block) grid with a resident VMEM accumulator / core.
    ncore = _NCORES if nb >= _NCORES else 1
    bpc = pl.cdiv(nb, ncore)
    if rows % tr != 0:
        mask_from = nb - 1          # last real block has a row overhang
    elif ncore * bpc != nb:
        mask_from = nb              # only phantom blocks need masking
    else:
        mask_from = None            # exact tiling: no masking anywhere
    if ncore * bpc == nb:
        idx = lambda c, j: (c * bpc + j, 0)
    else:                           # clamp phantom blocks onto the last block
        idx = lambda c, j: (jnp.minimum(c * bpc + j, nb - 1), 0)
    in_spec = pl.BlockSpec((tr, _LANES), idx)

    partial = pl.pallas_call(
        functools.partial(_bce_sum_kernel, rows=rows, tile_rows=tr, bpc=bpc,
                          mask_from=mask_from, weighted=weighted),
        out_shape=jax.ShapeDtypeStruct((ncore, _SUBLANES, _LANES), jnp.float32),
        grid_spec=pltpu.PrefetchScalarGridSpec(
            num_scalar_prefetch=0,
            grid=(ncore, bpc),
            in_specs=[in_spec] * len(operands),
            out_specs=pl.BlockSpec((1, _SUBLANES, _LANES),
                                   lambda c, j: (c, 0, 0))),
        compiler_params=_cparams(("parallel", "arbitrary")),
    )(*operands)
    return _finalize(jnp.sum(partial), reduction, n_elem, inputs.dtype)


if __name__ == "__main__":
    key = jax.random.PRNGKey(0)
    k1, k2 = jax.random.split(key)

    def ref_none(x, t, w=None):
        l = -(t * jnp.maximum(jnp.log(x), -100.0)
              + (1.0 - t) * jnp.maximum(jnp.log1p(-x), -100.0))
        if w is not None:
            l = l * jnp.broadcast_to(w, x.shape)
        return l

    # NCHW example: batch=2, channels=4, spatial=16x16
    shape = (2, 4, 16, 16)
    x = jax.nn.sigmoid(jax.random.normal(k1, shape, jnp.float32))
    t = jax.random.uniform(k2, shape, jnp.float32)
    r = ref_none(x, t)

    # reduction='mean' (default, no weight)
    loss = jax.block_until_ready(BCELoss()(x, t))
    assert jnp.allclose(loss, jnp.mean(r), rtol=1e-5, atol=1e-6), loss

    # reduction='none' (no weight)
    loss_none = jax.block_until_ready(BCELoss(reduction="none")(x, t))
    assert loss_none.shape == shape and loss_none.dtype == x.dtype
    assert jnp.allclose(loss_none, r, rtol=1e-5, atol=1e-6)

    # per-channel weight -> SMEM-prefetched region path ('sum' and 'none')
    w = jnp.linspace(0.5, 1.5, shape[1], dtype=jnp.float32).reshape(1, shape[1], 1, 1)
    loss_sum = jax.block_until_ready(BCELoss(weight=w, reduction="sum")(x, t))
    assert jnp.allclose(loss_sum, jnp.sum(ref_none(x, t, w)),
                        rtol=1e-4, atol=1e-3), loss_sum
    loss_wnone = jax.block_until_ready(BCELoss(weight=w, reduction="none")(x, t))
    assert loss_wnone.shape == shape
    assert jnp.allclose(loss_wnone, ref_none(x, t, w), rtol=1e-5, atol=1e-5)

    # tail + phantom-block coverage: 20 slab rows, 8-row blocks, odd block count
    shape2 = (2, 5, 16, 16)
    x2 = jax.nn.sigmoid(jax.random.normal(k1, shape2, jnp.float32))
    t2 = jax.random.uniform(k2, shape2, jnp.float32)
    lm = jax.block_until_ready(bce_loss(x2, t2, reduction="mean", block_rows=8))
    assert jnp.allclose(lm, jnp.mean(ref_none(x2, t2)), rtol=1e-5, atol=1e-6), lm

    # ragged (size % 128 != 0) fallback
    shape3 = (3, 5, 7)
    x3 = jax.nn.sigmoid(jax.random.normal(k1, shape3, jnp.float32))
    t3 = jax.random.uniform(k2, shape3, jnp.float32)
    ls3 = jax.block_until_ready(bce_loss(x3, t3, reduction="sum"))
    assert jnp.allclose(ls3, jnp.sum(ref_none(x3, t3)), rtol=1e-5, atol=1e-4), ls3

    print("KERNEL_OK")
</pallas_src>

<mosaic_0001>
module attributes {stable_mosaic.version = 11 : i64} {
  func.func @_bce_sum_kernel(%arg0: i32, %arg1: i32, %arg2: memref<16x128xf32, #tpu.memory_space<vmem>>, %arg3: memref<16x128xf32, #tpu.memory_space<vmem>>, %arg4: memref<1x8x128xf32, #tpu.memory_space<vmem>>) attributes {dimension_semantics = [#tpu.dimension_semantics<parallel>, #tpu.dimension_semantics<arbitrary>], iteration_bounds = array<i64: 1, 1>, scalar_prefetch = 0 : i64, scratch_operands = 0 : i64, tpu.core_type = #tpu.core_type<tc>, window_params = [{transform_indices = @transform_0, window_bounds = array<i64: 16, 128>}, {transform_indices = @transform_1, window_bounds = array<i64: 16, 128>}, {transform_indices = @transform_2, window_bounds = array<i64: 1, 8, 128>}]} {
    %c0_i32 = arith.constant 0 : i32
    %0 = arith.cmpi eq, %arg1, %c0_i32 : i32
    %1 = arith.extui %0 : i1 to i32
    %c0_i32_0 = arith.constant 0 : i32
    %2 = arith.cmpi ne, %1, %c0_i32_0 : i32
    scf.if %2 {
      %cst_14 = arith.constant 0.000000e+00 : f32
      %24 = vector.broadcast %cst_14 : f32 to vector<1x8x128xf32>
      %c0_15 = arith.constant 0 : index
      %c0_16 = arith.constant 0 : index
      %c0_17 = arith.constant 0 : index
      %25 = vector.load %arg4[%c0_15, %c0_16, %c0_17] : memref<1x8x128xf32, #tpu.memory_space<vmem>>, vector<1x8x128xf32>
      tpu.vector_store %arg4[%c0_15, %c0_16, %c0_17], %24 {strides = array<i32>} : memref<1x8x128xf32, #tpu.memory_space<vmem>>, vector<1x8x128xf32>,
    } else {
    }
    %c0 = arith.constant 0 : index
    %c0_1 = arith.constant 0 : index
    %3 = vector.load %arg2[%c0, %c0_1] : memref<16x128xf32, #tpu.memory_space<vmem>>, vector<16x128xf32>
    %c0_2 = arith.constant 0 : index
    %c0_3 = arith.constant 0 : index
    %4 = vector.load %arg3[%c0_2, %c0_3] : memref<16x128xf32, #tpu.memory_space<vmem>>, vector<16x128xf32>
    %5 = math.log %3 : vector<16x128xf32>
    %cst = arith.constant -1.000000e+02 : f32
    %6 = vector.broadcast %cst : f32 to vector<16x128xf32>
    %7 = arith.maximumf %5, %6 : vector<16x128xf32>
    %cst_4 = arith.constant 0.000000e+00 : f32
    %8 = vector.broadcast %cst_4 : f32 to vector<16x128xf32>
    %9 = arith.subf %8, %3 : vector<16x128xf32>
    %10 = math.log1p %9 : vector<16x128xf32>
    %cst_5 = arith.constant -1.000000e+02 : f32
    %11 = vector.broadcast %cst_5 : f32 to vector<16x128xf32>
    %12 = arith.maximumf %10, %11 : vector<16x128xf32>
    %13 = arith.subf %7, %12 : vector<16x128xf32>
    %14 = arith.mulf %4, %13 : vector<16x128xf32>
    %15 = arith.addf %12, %14 : vector<16x128xf32>
    %cst_6 = arith.constant 0.000000e+00 : f32
    %16 = vector.broadcast %cst_6 : f32 to vector<16x128xf32>
    %17 = arith.subf %16, %15 : vector<16x128xf32>
    %c0_7 = arith.constant 0 : index
    %c0_8 = arith.constant 0 : index
    %c0_9 = arith.constant 0 : index
    %18 = vector.load %arg4[%c0_7, %c0_8, %c0_9] : memref<1x8x128xf32, #tpu.memory_space<vmem>>, vector<1x8x128xf32>
    %19 = vector.shape_cast %17 : vector<16x128xf32> to vector<2x8x128xf32>
    %cst_10 = arith.constant dense<0.000000e+00> : vector<8x128xf32>
    %20 = vector.multi_reduction <add>, %19, %cst_10 [0] : vector<2x8x128xf32> to vector<8x128xf32>
    %21 = vector.shape_cast %20 : vector<8x128xf32> to vector<1x8x128xf32>
    %22 = arith.addf %18, %21 : vector<1x8x128xf32>
    %c0_11 = arith.constant 0 : index
    %c0_12 = arith.constant 0 : index
    %c0_13 = arith.constant 0 : index
    %23 = vector.load %arg4[%c0_11, %c0_12, %c0_13] : memref<1x8x128xf32, #tpu.memory_space<vmem>>, vector<1x8x128xf32>
    tpu.vector_store %arg4[%c0_11, %c0_12, %c0_13], %22 {strides = array<i32>} : memref<1x8x128xf32, #tpu.memory_space<vmem>>, vector<1x8x128xf32>,
    return
  }
  func.func @transform_0(%arg0: i32, %arg1: i32) -> (i32, i32) {
    %c1_i32 = arith.constant 1 : i32
    %0 = arith.muli %arg0, %c1_i32 : i32
    %1 = arith.addi %0, %arg1 : i32
    %c0_i32 = arith.constant 0 : i32
    %c0_i32_0 = arith.constant 0 : i32
    return %1, %c0_i32 : i32, i32
  }
  func.func @transform_1(%arg0: i32, %arg1: i32) -> (i32, i32) {
    %c1_i32 = arith.constant 1 : i32
    %0 = arith.muli %arg0, %c1_i32 : i32
    %1 = arith.addi %0, %arg1 : i32
    %c0_i32 = arith.constant 0 : i32
    %c0_i32_0 = arith.constant 0 : i32
    return %1, %c0_i32 : i32, i32
  }
  func.func @transform_2(%arg0: i32, %arg1: i32) -> (i32, i32, i32) {
    %c0_i32 = arith.constant 0 : i32
    %c0_i32_0 = arith.constant 0 : i32
    %c0_i32_1 = arith.constant 0 : i32
    return %arg0, %c0_i32, %c0_i32_0 : i32, i32, i32
  }
}

</mosaic_0001>

<llo_original>
// kernel: bce_loss.1
$region0: #{bce_loss.1}
  #allocation0 [shape = 'u32[]', space=smem, size = 0x4, offset = 0x4, fixed_abs, tag = 'smem constant byte address 0x4 - core index']
  #allocation1 [shape = 'u32[72,128]{1,0:T(1,128)}', space=vmem, size = 0x9000, scoped, tag = 'internal scratch']
  %s0 = inlined_call_operand.vmem [shape: f32[16,128], index: 0, kind: input, shape index: {}]
  %s1 = inlined_call_operand.vmem [shape: f32[16,128], index: 1, kind: input, shape index: {}]
  %s2 = inlined_call_operand.vmem [shape: f32[1,8,128], index: 2, kind: output, shape index: {}]
  %s3 = sld [smem:[#allocation0]]
  $region22: #{bce_loss.1} parent=0
    _
  %s5 = ssub.s32 1, %s3
  %s6 = scalar_select 0, %s5, %s3
  // Predicated region
  $region2: #{bce_loss.1} parent=0 // pred_check
    _
  $region3: #{bce_loss.1} parent=0 // pred_check_branch
    %8 = sbr.rel (0) target = $region5
  $region4: #{bce_loss.1} parent=0 // pred_region
    %s9 = sadd.s32 0, 0
    %s10 = smul.u32 2, %s9
    %p11 = scmp.lt.s32.totalorder %s10, 1
    %s12 = scalar_select %p11, %s10, 1
    %s13 = smul.addr %s12, 8
    %s14 = scalar_lea.vmem %s0, %s13
    %s15 = sadd.s32 0, 0
    %s16 = smul.u32 2, %s15
  $region5: #{bce_loss.1} parent=0 // pred_fallthru
    _
  // Predicated region
  $region6: #{bce_loss.1} parent=0 // pred_check
    _
  $region7: #{bce_loss.1} parent=0 // pred_check_branch
    %18 = sbr.rel (0) target = $region9
  $region8: #{bce_loss.1} parent=0 // pred_region
    %s19 = sadd.s32 0, 0
    %s20 = smul.u32 2, %s19
    %p21 = scmp.lt.s32.totalorder %s20, 1
    %s22 = scalar_select %p21, %s20, 1
    %s23 = smul.addr %s22, 8
    %s24 = scalar_lea.vmem %s1, %s23
    %s25 = sadd.s32 0, 0
    %s26 = smul.u32 2, %s25
  $region9: #{bce_loss.1} parent=0 // pred_fallthru
    _
  %s27 = sadd.s32 0, 0
  %s28 = smul.u32 2, %s27
  %p29 = scmp.lt.s32.totalorder %s28, 1
  %s30 = scalar_select %p29, %s28, 1
  %s31 = smul.addr %s30, 8
  %s32 = scalar_lea.vmem %s0, %s31
  %s33 = sadd.s32 0, 0
  %s34 = smul.u32 2, %s33
  %p35 = scmp.lt.s32.totalorder %s34, 1
  %s36 = scalar_select %p35, %s34, 1
  %s37 = smul.addr %s36, 8
  %s38 = scalar_lea.vmem %s1, %s37
  %s39 = sadd.s32 0, 0
  %s40 = smul.u32 2, %s39
  %p41 = scmp.lt.s32.totalorder %s40, 1
  %s42 = scalar_select %p41, %s40, 1
  %s43 = smul.addr %s42, 8
  %s44 = scalar_lea.vmem %s0, %s43
  %s45 = sadd.s32 0, 0
  %s46 = smul.u32 2, %s45
  %s47 = sadd.s32 0, 0
  %s48 = smul.u32 2, %s47
  %p49 = scmp.lt.s32.totalorder %s48, 1
  %s50 = scalar_select %p49, %s48, 1
  %s51 = smul.addr %s50, 8
  %s52 = scalar_lea.vmem %s1, %s51
  %s53 = sadd.s32 0, 0
  %s54 = smul.u32 2, %s53
  %p55 = scmp.eq.s32.totalorder 0, 0
  // Predicated region
  $region10: #{bce_loss.1} parent=0 // pred_check
    %p56 = pneg %p55
  $region11: #{bce_loss.1} parent=0 // pred_check_branch
    %58 = sbr.rel (%p56) target = $region13
  $region12: #{bce_loss.1} parent=0 // pred_region
    %59 = vst [vmem:[%s2] sm:$0xff] 0.0
  $region13: #{bce_loss.1} parent=0 // pred_fallthru
    _
  %v60 = vld [vmem:[%s44] sm:$0xff]
  %v61 = vld [vmem:[%s44 + $0x8] sm:$0xff]
  %v62 = vld [vmem:[%s52] sm:$0xff]
  %v63 = vld [vmem:[%s52 + $0x8] sm:$0xff]
  %v64 = vlog2.pop %v60
  %v65 = vmul.f32 %v64, 0.6931472
  %v66 = vlog2.pop %v61
  %v67 = vmul.f32 %v66, 0.6931472
  %v68 = vmax.f32 %v65, -100.0
  %v69 = vmax.f32 %v67, -100.0
  %v70 = vsub.f32 0.0, %v60
  %v71 = vsub.f32 0.0, %v61
  %v72 = vadd.f32 %v70, 1.0
  %v73 = vlog2.pop %v72
  %v74 = vmul.f32 %v73, 0.6931472
  %v75 = vmul.f32 -0.5, %v70
  %v76 = vadd.f32 %v75, 1.0
  %v77 = vmul.f32 %v76, %v70
  %v78 = vand.u32 2147483647, %v70
  %vm79 = vcmp.lt.f32.partialorder %v78, 0.0004427343
  %v80 = vsel %vm79, %v77, %v74
  %v81 = vadd.f32 %v71, 1.0
  %v82 = vlog2.pop %v81
  %v83 = vmul.f32 %v82, 0.6931472
  %v84 = vmul.f32 -0.5, %v71
  %v85 = vadd.f32 %v84, 1.0
  %v86 = vmul.f32 %v85, %v71
  %v87 = vand.u32 2147483647, %v71
  %vm88 = vcmp.lt.f32.partialorder %v87, 0.0004427343
  %v89 = vsel %vm88, %v86, %v83
  %v90 = vmax.f32 %v80, -100.0
  %v91 = vmax.f32 %v89, -100.0
  %v92 = vsub.f32 %v68, %v90
  %v93 = vsub.f32 %v69, %v91
  %v94 = vmul.f32 %v62, %v92
  %v95 = vmul.f32 %v63, %v93
  %v96 = vadd.f32 %v90, %v94
  %v97 = vadd.f32 %v91, %v95
  %v98 = vsub.f32 0.0, %v96
  %v99 = vsub.f32 0.0, %v97
  %v100 = vld [vmem:[%s2] sm:$0xff]
  %v101 = vadd.f32 %v98, %v99
  %v102 = vadd.f32 %v100, %v101
  %103 = vst [vmem:[%s2] sm:$0xff] %v102
  // Predicated region
  $region14: #{bce_loss.1} parent=0 // pred_check
    _
  $region15: #{bce_loss.1} parent=0 // pred_check_branch
    %105 = sbr.rel (0) target = $region17
  $region16: #{bce_loss.1} parent=0 // pred_region
    _
  $region17: #{bce_loss.1} parent=0 // pred_fallthru
    _
  // Predicated region
  $region18: #{bce_loss.1} parent=0 // pred_check
    _
  $region19: #{bce_loss.1} parent=0 // pred_check_branch
    %107 = sbr.rel (0) target = $region21
  $region20: #{bce_loss.1} parent=0 // pred_region
    _
  $region21: #{bce_loss.1} parent=0 // pred_fallthru
    _

</llo_original>
